<compile_context>
chip_gen: v5e
topology: v5e:2x2
jax: 0.10.0
libtpu: 0.0.40
codegen_flags: <defaults>
</compile_context>

<pallas_src>
import jax
import jax.numpy as jnp
from jax import lax
from jax.experimental import pallas as pl
from jax.experimental.pallas import tpu as pltpu

POOL = 5            # pool_kernal_size
PAD = POOL // 2     # 'same' padding for the stride-1 maxpool
NEG_SLOPE = 0.1     # LeakyReLU slope assumed for the CBL unit
NEG = -3.0e38       # acts as -inf padding for the maxpool (f32-safe)


def _leaky(v):
    return jnp.where(v > 0, v, NEG_SLOPE * v)


def sppf_forward(x_nchw, w1, b1, w2, b2):
    """x_nchw: (N, Cin, H, W) f32.  w1: (Cmid, Cin) BN-folded.  b1: (Cmid, 1).
    w2: (4, Cout, Cmid) BN-folded (one block per concat branch).  b2: (Cout, 1)."""
    N, Cin, H, W = x_nchw.shape
    HW = H * W
    Cmid = w1.shape[0]
    Cout = w2.shape[1]

    # Static w/h position maps for the 'same' pool padding, passed as inputs so
    # the kernel needs no iota / integer-mod / reshape.
    wpos = jnp.tile(jnp.arange(W, dtype=jnp.int32), (Cmid, H))                 # f -> w
    hpos = jnp.tile(jnp.repeat(jnp.arange(H, dtype=jnp.int32), W), (Cmid, 1))  # f -> h

    def kernel(wpos_ref, hpos_ref, x_ref, w1_ref, b1_ref, w2_ref, b2_ref, o_ref):
        wp = wpos_ref[...]            # (Cmid, HW) int32
        hp = hpos_ref[...]            # (Cmid, HW) int32
        x = x_ref[0]                  # (Cin, HW) lane-dense
        w1v = w1_ref[...]             # (Cmid, Cin)
        w2v = w2_ref[...]             # (4, Cout, Cmid)

        # ---- cbl1: 1x1 conv as unrolled VPU broadcast-FMAs (+ bias + leaky) ----
        y = w1v[:, 0:1] * x[0:1, :]
        for c in range(1, Cin):
            y = y + w1v[:, c:c + 1] * x[c:c + 1, :]
        y = _leaky(y + b1_ref[...])                     # (Cmid, HW)

        # Hoisted edge-validity masks (reused by all three pools).
        wmask_f = [wp < (W - d) for d in range(1, PAD + 1)]
        wmask_b = [wp >= d for d in range(1, PAD + 1)]
        hmask_f = [hp < (H - d) for d in range(1, PAD + 1)]
        hmask_b = [hp >= d for d in range(1, PAD + 1)]

        # ---- MaxPool2d(5, stride=1, padding=2): separable max via lane rolls.
        # pltpu.roll follows np.roll semantics: roll(v, s)[:, f] = v[:, (f - s) % HW],
        # so shift HW-d reads the "+d" neighbour and shift d reads the "-d" one.
        # Wrapped elements always land in masked (out-of-row / out-of-image) slots.
        def maxpool(v):
            acc = v
            for d in range(1, PAD + 1):        # W direction (within rows)
                acc = jnp.maximum(acc, jnp.where(wmask_f[d - 1],
                                                 pltpu.roll(v, HW - d, 1), NEG))
                acc = jnp.maximum(acc, jnp.where(wmask_b[d - 1],
                                                 pltpu.roll(v, d, 1), NEG))
            r = acc
            acc = r
            for d in range(1, PAD + 1):        # H direction (across rows)
                acc = jnp.maximum(acc, jnp.where(hmask_f[d - 1],
                                                 pltpu.roll(r, HW - d * W, 1), NEG))
                acc = jnp.maximum(acc, jnp.where(hmask_b[d - 1],
                                                 pltpu.roll(r, d * W, 1), NEG))
            return acc

        # ---- cbl2 on concat([y0,y1,y2,y3]) decomposed as sum of per-branch
        # 1x1 convs, accumulated right after each pooled tensor is produced so
        # only one pooled tensor is ever live.
        def branch(yk, k):
            zk = w2v[k, :, 0:1] * yk[0:1, :]
            for c in range(1, Cmid):
                zk = zk + w2v[k, :, c:c + 1] * yk[c:c + 1, :]
            return zk                                   # (Cout, HW)

        z = branch(y, 0)
        y = maxpool(y); z = z + branch(y, 1)
        y = maxpool(y); z = z + branch(y, 2)
        y = maxpool(y); z = z + branch(y, 3)
        z = _leaky(z + b2_ref[...])
        o_ref[0] = z.astype(o_ref.dtype)                # lane-dense (Cout, HW) store

    out_flat = pl.pallas_call(
        kernel,
        out_shape=jax.ShapeDtypeStruct((N, Cout, HW), jnp.float32),
        grid_spec=pltpu.PrefetchScalarGridSpec(
            num_scalar_prefetch=0,
            grid=(N,),
            in_specs=[
                pl.BlockSpec((Cmid, HW), lambda n: (0, 0)),        # wpos
                pl.BlockSpec((Cmid, HW), lambda n: (0, 0)),        # hpos
                pl.BlockSpec((1, Cin, HW), lambda n: (n, 0, 0)),   # x
                pl.BlockSpec((Cmid, Cin), lambda n: (0, 0)),       # w1 (BN folded)
                pl.BlockSpec((Cmid, 1), lambda n: (0, 0)),         # b1
                pl.BlockSpec((4, Cout, Cmid), lambda n: (0, 0, 0)),# w2 (BN folded)
                pl.BlockSpec((Cout, 1), lambda n: (0, 0)),         # b2
            ],
            out_specs=pl.BlockSpec((1, Cout, HW), lambda n: (n, 0, 0)),
        ),
        compiler_params=pltpu.CompilerParams(
            dimension_semantics=("parallel",),   # batch items are independent
        ),
    )(wpos, hpos, x_nchw.reshape(N, Cin, HW), w1, b1, w2, b2)

    return out_flat.reshape(N, Cout, H, W)


def sppf_ref(x, w1, b1, w2, b2):
    """Pure-JAX NCHW reference for the correctness check."""
    hi = lax.Precision.HIGHEST
    y0 = _leaky(jnp.einsum('mc,nchw->nmhw', w1, x, precision=hi)
                + b1.reshape(1, -1, 1, 1))

    def mp(v):
        return lax.reduce_window(
            v, -jnp.inf, lax.max,
            (1, 1, POOL, POOL), (1, 1, 1, 1),
            ((0, 0), (0, 0), (PAD, PAD), (PAD, PAD)))

    y1 = mp(y0)
    y2 = mp(y1)
    y3 = mp(y2)
    cat = jnp.concatenate([y0, y1, y2, y3], axis=1)                 # (N, 4*Cmid, H, W)
    w2full = jnp.concatenate([w2[0], w2[1], w2[2], w2[3]], axis=1)  # (Cout, 4*Cmid)
    z = jnp.einsum('oc,nchw->nohw', w2full, cat, precision=hi) + b2.reshape(1, -1, 1, 1)
    return _leaky(z)


if __name__ == "__main__":
    # Small shapes consistent with the module: NCHW input (2, 4, 16, 16)
    N, Cin, H, W = 2, 4, 16, 16
    Cmid = Cin // 2          # c_ = in_channels // 2
    Cout = 4                 # out_channels
    eps = 1e-5

    key = jax.random.PRNGKey(0)
    ks = jax.random.split(key, 11)

    x = jax.random.normal(ks[0], (N, Cin, H, W), jnp.float32)

    # cbl1: Conv2d(1x1, no bias) + eval-mode BN folded into (weight, bias).
    w1_raw = jax.random.normal(ks[1], (Cmid, Cin), jnp.float32) * 0.5
    g1 = 1.0 + 0.1 * jax.random.normal(ks[2], (Cmid,), jnp.float32)
    be1 = 0.1 * jax.random.normal(ks[3], (Cmid,), jnp.float32)
    rm1 = 0.1 * jax.random.normal(ks[4], (Cmid,), jnp.float32)
    rv1 = 1.0 + 0.1 * jnp.abs(jax.random.normal(ks[5], (Cmid,), jnp.float32))
    s1 = g1 / jnp.sqrt(rv1 + eps)
    w1 = w1_raw * s1[:, None]                       # BN scale folded into weight
    b1 = (be1 - s1 * rm1).reshape(Cmid, 1)

    # cbl2: weight stored as (4, Cout, Cmid) — one block per concat branch.
    w2_raw = jax.random.normal(ks[6], (4, Cout, Cmid), jnp.float32) * 0.5
    g2 = 1.0 + 0.1 * jax.random.normal(ks[7], (Cout,), jnp.float32)
    be2 = 0.1 * jax.random.normal(ks[8], (Cout,), jnp.float32)
    rm2 = 0.1 * jax.random.normal(ks[9], (Cout,), jnp.float32)
    rv2 = 1.0 + 0.1 * jnp.abs(jax.random.normal(ks[10], (Cout,), jnp.float32))
    s2 = g2 / jnp.sqrt(rv2 + eps)
    w2 = w2_raw * s2[None, :, None]
    b2 = (be2 - s2 * rm2).reshape(Cout, 1)

    out = sppf_forward(x, w1, b1, w2, b2)
    out = jax.block_until_ready(out)

    ref = sppf_ref(x, w1, b1, w2, b2)
    assert out.shape == (N, Cout, H, W)
    max_err = float(jnp.max(jnp.abs(out - ref)))
    assert jnp.allclose(out, ref, atol=1e-4, rtol=1e-4), max_err

    print("KERNEL_OK")
</pallas_src>

<mosaic_0001>
module attributes {stable_mosaic.version = 11 : i64} {
  func.func @kernel(%arg0: i32, %arg1: memref<2x256xi32, #tpu.memory_space<vmem>>, %arg2: memref<2x256xi32, #tpu.memory_space<vmem>>, %arg3: memref<1x4x256xf32, #tpu.memory_space<vmem>>, %arg4: memref<2x4xf32, #tpu.memory_space<vmem>>, %arg5: memref<2x1xf32, #tpu.memory_space<vmem>>, %arg6: memref<4x4x2xf32, #tpu.memory_space<vmem>>, %arg7: memref<4x1xf32, #tpu.memory_space<vmem>>, %arg8: memref<1x4x256xf32, #tpu.memory_space<vmem>>) attributes {dimension_semantics = [#tpu.dimension_semantics<parallel>], iteration_bounds = array<i64: 2>, scalar_prefetch = 0 : i64, scratch_operands = 0 : i64, tpu.core_type = #tpu.core_type<tc>, window_params = [{pipeline_mode = #tpu.pipeline_mode<synchronous>, transform_indices = @transform_0, window_bounds = array<i64: 2, 256>}, {pipeline_mode = #tpu.pipeline_mode<synchronous>, transform_indices = @transform_1, window_bounds = array<i64: 2, 256>}, {transform_indices = @transform_2, window_bounds = array<i64: 1, 4, 256>}, {pipeline_mode = #tpu.pipeline_mode<synchronous>, transform_indices = @transform_3, window_bounds = array<i64: 2, 4>}, {pipeline_mode = #tpu.pipeline_mode<synchronous>, transform_indices = @transform_4, window_bounds = array<i64: 2, 1>}, {pipeline_mode = #tpu.pipeline_mode<synchronous>, transform_indices = @transform_5, window_bounds = array<i64: 4, 4, 2>}, {pipeline_mode = #tpu.pipeline_mode<synchronous>, transform_indices = @transform_6, window_bounds = array<i64: 4, 1>}, {transform_indices = @transform_7, window_bounds = array<i64: 1, 4, 256>}]} {
    %c0 = arith.constant 0 : index
    %c0_0 = arith.constant 0 : index
    %0 = vector.load %arg1[%c0, %c0_0] : memref<2x256xi32, #tpu.memory_space<vmem>>, vector<2x256xi32>
    %c0_1 = arith.constant 0 : index
    %c0_2 = arith.constant 0 : index
    %1 = vector.load %arg2[%c0_1, %c0_2] : memref<2x256xi32, #tpu.memory_space<vmem>>, vector<2x256xi32>
    %c0_3 = arith.constant 0 : index
    %c0_4 = arith.constant 0 : index
    %c0_5 = arith.constant 0 : index
    %2 = vector.load %arg3[%c0_3, %c0_4, %c0_5] : memref<1x4x256xf32, #tpu.memory_space<vmem>>, vector<1x4x256xf32>
    %3 = vector.shape_cast %2 : vector<1x4x256xf32> to vector<4x256xf32>
    %c0_6 = arith.constant 0 : index
    %c0_7 = arith.constant 0 : index
    %4 = vector.load %arg4[%c0_6, %c0_7] : memref<2x4xf32, #tpu.memory_space<vmem>>, vector<2x4xf32>
    %c0_8 = arith.constant 0 : index
    %c0_9 = arith.constant 0 : index
    %c0_10 = arith.constant 0 : index
    %5 = vector.load %arg6[%c0_8, %c0_9, %c0_10] : memref<4x4x2xf32, #tpu.memory_space<vmem>>, vector<4x4x2xf32>
    %6 = vector.extract_strided_slice %4 {offsets = [0, 0], sizes = [2, 1], strides = [1, 1]} : vector<2x4xf32> to vector<2x1xf32>
    %7 = vector.extract_strided_slice %3 {offsets = [0, 0], sizes = [1, 256], strides = [1, 1]} : vector<4x256xf32> to vector<1x256xf32>
    %8 = vector.broadcast %6 : vector<2x1xf32> to vector<2x256xf32>
    %9 = vector.broadcast %7 : vector<1x256xf32> to vector<2x256xf32>
    %10 = arith.mulf %8, %9 : vector<2x256xf32>
    %11 = vector.extract_strided_slice %4 {offsets = [0, 1], sizes = [2, 1], strides = [1, 1]} : vector<2x4xf32> to vector<2x1xf32>
    %12 = vector.extract_strided_slice %3 {offsets = [1, 0], sizes = [1, 256], strides = [1, 1]} : vector<4x256xf32> to vector<1x256xf32>
    %13 = vector.broadcast %11 : vector<2x1xf32> to vector<2x256xf32>
    %14 = vector.broadcast %12 : vector<1x256xf32> to vector<2x256xf32>
    %15 = arith.mulf %13, %14 : vector<2x256xf32>
    %16 = arith.addf %10, %15 : vector<2x256xf32>
    %17 = vector.extract_strided_slice %4 {offsets = [0, 2], sizes = [2, 1], strides = [1, 1]} : vector<2x4xf32> to vector<2x1xf32>
    %18 = vector.extract_strided_slice %3 {offsets = [2, 0], sizes = [1, 256], strides = [1, 1]} : vector<4x256xf32> to vector<1x256xf32>
    %19 = vector.broadcast %17 : vector<2x1xf32> to vector<2x256xf32>
    %20 = vector.broadcast %18 : vector<1x256xf32> to vector<2x256xf32>
    %21 = arith.mulf %19, %20 : vector<2x256xf32>
    %22 = arith.addf %16, %21 : vector<2x256xf32>
    %23 = vector.extract_strided_slice %4 {offsets = [0, 3], sizes = [2, 1], strides = [1, 1]} : vector<2x4xf32> to vector<2x1xf32>
    %24 = vector.extract_strided_slice %3 {offsets = [3, 0], sizes = [1, 256], strides = [1, 1]} : vector<4x256xf32> to vector<1x256xf32>
    %25 = vector.broadcast %23 : vector<2x1xf32> to vector<2x256xf32>
    %26 = vector.broadcast %24 : vector<1x256xf32> to vector<2x256xf32>
    %27 = arith.mulf %25, %26 : vector<2x256xf32>
    %28 = arith.addf %22, %27 : vector<2x256xf32>
    %c0_11 = arith.constant 0 : index
    %c0_12 = arith.constant 0 : index
    %29 = vector.load %arg5[%c0_11, %c0_12] : memref<2x1xf32, #tpu.memory_space<vmem>>, vector<2x1xf32>
    %30 = vector.broadcast %29 : vector<2x1xf32> to vector<2x256xf32>
    %31 = arith.addf %28, %30 : vector<2x256xf32>
    %cst = arith.constant 0.000000e+00 : f32
    %32 = vector.broadcast %cst : f32 to vector<2x256xf32>
    %33 = arith.cmpf ogt, %31, %32 : vector<2x256xf32>
    %cst_13 = arith.constant 1.000000e-01 : f32
    %34 = vector.broadcast %cst_13 : f32 to vector<2x256xf32>
    %35 = arith.mulf %34, %31 : vector<2x256xf32>
    %36 = arith.select %33, %31, %35 : vector<2x256xi1>, vector<2x256xf32>
    %c15_i32 = arith.constant 15 : i32
    %37 = vector.broadcast %c15_i32 : i32 to vector<2x256xi32>
    %38 = arith.cmpi slt, %0, %37 : vector<2x256xi32>
    %c14_i32 = arith.constant 14 : i32
    %39 = vector.broadcast %c14_i32 : i32 to vector<2x256xi32>
    %40 = arith.cmpi slt, %0, %39 : vector<2x256xi32>
    %c1_i32 = arith.constant 1 : i32
    %41 = vector.broadcast %c1_i32 : i32 to vector<2x256xi32>
    %42 = arith.cmpi sge, %0, %41 : vector<2x256xi32>
    %c2_i32 = arith.constant 2 : i32
    %43 = vector.broadcast %c2_i32 : i32 to vector<2x256xi32>
    %44 = arith.cmpi sge, %0, %43 : vector<2x256xi32>
    %c15_i32_14 = arith.constant 15 : i32
    %45 = vector.broadcast %c15_i32_14 : i32 to vector<2x256xi32>
    %46 = arith.cmpi slt, %1, %45 : vector<2x256xi32>
    %c14_i32_15 = arith.constant 14 : i32
    %47 = vector.broadcast %c14_i32_15 : i32 to vector<2x256xi32>
    %48 = arith.cmpi slt, %1, %47 : vector<2x256xi32>
    %c1_i32_16 = arith.constant 1 : i32
    %49 = vector.broadcast %c1_i32_16 : i32 to vector<2x256xi32>
    %50 = arith.cmpi sge, %1, %49 : vector<2x256xi32>
    %c2_i32_17 = arith.constant 2 : i32
    %51 = vector.broadcast %c2_i32_17 : i32 to vector<2x256xi32>
    %52 = arith.cmpi sge, %1, %51 : vector<2x256xi32>
    %53 = vector.extract_strided_slice %5 {offsets = [0, 0, 0], sizes = [1, 4, 1], strides = [1, 1, 1]} : vector<4x4x2xf32> to vector<1x4x1xf32>
    %54 = vector.shape_cast %53 : vector<1x4x1xf32> to vector<4x1xf32>
    %55 = vector.extract_strided_slice %36 {offsets = [0, 0], sizes = [1, 256], strides = [1, 1]} : vector<2x256xf32> to vector<1x256xf32>
    %56 = vector.broadcast %54 : vector<4x1xf32> to vector<4x256xf32>
    %57 = vector.broadcast %55 : vector<1x256xf32> to vector<4x256xf32>
    %58 = arith.mulf %56, %57 : vector<4x256xf32>
    %59 = vector.extract_strided_slice %5 {offsets = [0, 0, 1], sizes = [1, 4, 1], strides = [1, 1, 1]} : vector<4x4x2xf32> to vector<1x4x1xf32>
    %60 = vector.shape_cast %59 : vector<1x4x1xf32> to vector<4x1xf32>
    %61 = vector.extract_strided_slice %36 {offsets = [1, 0], sizes = [1, 256], strides = [1, 1]} : vector<2x256xf32> to vector<1x256xf32>
    %62 = vector.broadcast %60 : vector<4x1xf32> to vector<4x256xf32>
    %63 = vector.broadcast %61 : vector<1x256xf32> to vector<4x256xf32>
    %64 = arith.mulf %62, %63 : vector<4x256xf32>
    %65 = arith.addf %58, %64 : vector<4x256xf32>
    %c255_i32 = arith.constant 255 : i32
    %66 = tpu.dynamic_rotate %36 by %c255_i32 dim 1 : vector<2x256xf32>, i32 -> vector<2x256xf32>
    %cst_18 = arith.constant -3.000000e+38 : f32
    %67 = vector.broadcast %cst_18 : f32 to vector<2x256xf32>
    %68 = arith.select %38, %66, %67 : vector<2x256xi1>, vector<2x256xf32>
    %69 = arith.maximumf %36, %68 : vector<2x256xf32>
    %c1_i32_19 = arith.constant 1 : i32
    %70 = tpu.dynamic_rotate %36 by %c1_i32_19 dim 1 : vector<2x256xf32>, i32 -> vector<2x256xf32>
    %cst_20 = arith.constant -3.000000e+38 : f32
    %71 = vector.broadcast %cst_20 : f32 to vector<2x256xf32>
    %72 = arith.select %42, %70, %71 : vector<2x256xi1>, vector<2x256xf32>
    %73 = arith.maximumf %69, %72 : vector<2x256xf32>
    %c254_i32 = arith.constant 254 : i32
    %74 = tpu.dynamic_rotate %36 by %c254_i32 dim 1 : vector<2x256xf32>, i32 -> vector<2x256xf32>
    %cst_21 = arith.constant -3.000000e+38 : f32
    %75 = vector.broadcast %cst_21 : f32 to vector<2x256xf32>
    %76 = arith.select %40, %74, %75 : vector<2x256xi1>, vector<2x256xf32>
    %77 = arith.maximumf %73, %76 : vector<2x256xf32>
    %c2_i32_22 = arith.constant 2 : i32
    %78 = tpu.dynamic_rotate %36 by %c2_i32_22 dim 1 : vector<2x256xf32>, i32 -> vector<2x256xf32>
    %cst_23 = arith.constant -3.000000e+38 : f32
    %79 = vector.broadcast %cst_23 : f32 to vector<2x256xf32>
    %80 = arith.select %44, %78, %79 : vector<2x256xi1>, vector<2x256xf32>
    %81 = arith.maximumf %77, %80 : vector<2x256xf32>
    %c240_i32 = arith.constant 240 : i32
    %82 = tpu.dynamic_rotate %81 by %c240_i32 dim 1 : vector<2x256xf32>, i32 -> vector<2x256xf32>
    %cst_24 = arith.constant -3.000000e+38 : f32
    %83 = vector.broadcast %cst_24 : f32 to vector<2x256xf32>
    %84 = arith.select %46, %82, %83 : vector<2x256xi1>, vector<2x256xf32>
    %85 = arith.maximumf %81, %84 : vector<2x256xf32>
    %c16_i32 = arith.constant 16 : i32
    %86 = tpu.dynamic_rotate %81 by %c16_i32 dim 1 : vector<2x256xf32>, i32 -> vector<2x256xf32>
    %cst_25 = arith.constant -3.000000e+38 : f32
    %87 = vector.broadcast %cst_25 : f32 to vector<2x256xf32>
    %88 = arith.select %50, %86, %87 : vector<2x256xi1>, vector<2x256xf32>
    %89 = arith.maximumf %85, %88 : vector<2x256xf32>
    %c224_i32 = arith.constant 224 : i32
    %90 = tpu.dynamic_rotate %81 by %c224_i32 dim 1 : vector<2x256xf32>, i32 -> vector<2x256xf32>
    %cst_26 = arith.constant -3.000000e+38 : f32
    %91 = vector.broadcast %cst_26 : f32 to vector<2x256xf32>
    %92 = arith.select %48, %90, %91 : vector<2x256xi1>, vector<2x256xf32>
    %93 = arith.maximumf %89, %92 : vector<2x256xf32>
    %c32_i32 = arith.constant 32 : i32
    %94 = tpu.dynamic_rotate %81 by %c32_i32 dim 1 : vector<2x256xf32>, i32 -> vector<2x256xf32>
    %cst_27 = arith.constant -3.000000e+38 : f32
    %95 = vector.broadcast %cst_27 : f32 to vector<2x256xf32>
    %96 = arith.select %52, %94, %95 : vector<2x256xi1>, vector<2x256xf32>
    %97 = arith.maximumf %93, %96 : vector<2x256xf32>
    %98 = vector.extract_strided_slice %5 {offsets = [1, 0, 0], sizes = [1, 4, 1], strides = [1, 1, 1]} : vector<4x4x2xf32> to vector<1x4x1xf32>
    %99 = vector.shape_cast %98 : vector<1x4x1xf32> to vector<4x1xf32>
    %100 = vector.extract_strided_slice %97 {offsets = [0, 0], sizes = [1, 256], strides = [1, 1]} : vector<2x256xf32> to vector<1x256xf32>
    %101 = vector.broadcast %99 : vector<4x1xf32> to vector<4x256xf32>
    %102 = vector.broadcast %100 : vector<1x256xf32> to vector<4x256xf32>
    %103 = arith.mulf %101, %102 : vector<4x256xf32>
    %104 = vector.extract_strided_slice %5 {offsets = [1, 0, 1], sizes = [1, 4, 1], strides = [1, 1, 1]} : vector<4x4x2xf32> to vector<1x4x1xf32>
    %105 = vector.shape_cast %104 : vector<1x4x1xf32> to vector<4x1xf32>
    %106 = vector.extract_strided_slice %97 {offsets = [1, 0], sizes = [1, 256], strides = [1, 1]} : vector<2x256xf32> to vector<1x256xf32>
    %107 = vector.broadcast %105 : vector<4x1xf32> to vector<4x256xf32>
    %108 = vector.broadcast %106 : vector<1x256xf32> to vector<4x256xf32>
    %109 = arith.mulf %107, %108 : vector<4x256xf32>
    %110 = arith.addf %103, %109 : vector<4x256xf32>
    %111 = arith.addf %65, %110 : vector<4x256xf32>
    %c255_i32_28 = arith.constant 255 : i32
    %112 = tpu.dynamic_rotate %97 by %c255_i32_28 dim 1 : vector<2x256xf32>, i32 -> vector<2x256xf32>
    %cst_29 = arith.constant -3.000000e+38 : f32
    %113 = vector.broadcast %cst_29 : f32 to vector<2x256xf32>
    %114 = arith.select %38, %112, %113 : vector<2x256xi1>, vector<2x256xf32>
    %115 = arith.maximumf %97, %114 : vector<2x256xf32>
    %c1_i32_30 = arith.constant 1 : i32
    %116 = tpu.dynamic_rotate %97 by %c1_i32_30 dim 1 : vector<2x256xf32>, i32 -> vector<2x256xf32>
    %cst_31 = arith.constant -3.000000e+38 : f32
    %117 = vector.broadcast %cst_31 : f32 to vector<2x256xf32>
    %118 = arith.select %42, %116, %117 : vector<2x256xi1>, vector<2x256xf32>
    %119 = arith.maximumf %115, %118 : vector<2x256xf32>
    %c254_i32_32 = arith.constant 254 : i32
    %120 = tpu.dynamic_rotate %97 by %c254_i32_32 dim 1 : vector<2x256xf32>, i32 -> vector<2x256xf32>
    %cst_33 = arith.constant -3.000000e+38 : f32
    %121 = vector.broadcast %cst_33 : f32 to vector<2x256xf32>
    %122 = arith.select %40, %120, %121 : vector<2x256xi1>, vector<2x256xf32>
    %123 = arith.maximumf %119, %122 : vector<2x256xf32>
    %c2_i32_34 = arith.constant 2 : i32
    %124 = tpu.dynamic_rotate %97 by %c2_i32_34 dim 1 : vector<2x256xf32>, i32 -> vector<2x256xf32>
    %cst_35 = arith.constant -3.000000e+38 : f32
    %125 = vector.broadcast %cst_35 : f32 to vector<2x256xf32>
    %126 = arith.select %44, %124, %125 : vector<2x256xi1>, vector<2x256xf32>
    %127 = arith.maximumf %123, %126 : vector<2x256xf32>
    %c240_i32_36 = arith.constant 240 : i32
    %128 = tpu.dynamic_rotate %127 by %c240_i32_36 dim 1 : vector<2x256xf32>, i32 -> vector<2x256xf32>
    %cst_37 = arith.constant -3.000000e+38 : f32
    %129 = vector.broadcast %cst_37 : f32 to vector<2x256xf32>
    %130 = arith.select %46, %128, %129 : vector<2x256xi1>, vector<2x256xf32>
    %131 = arith.maximumf %127, %130 : vector<2x256xf32>
    %c16_i32_38 = arith.constant 16 : i32
    %132 = tpu.dynamic_rotate %127 by %c16_i32_38 dim 1 : vector<2x256xf32>, i32 -> vector<2x256xf32>
    %cst_39 = arith.constant -3.000000e+38 : f32
    %133 = vector.broadcast %cst_39 : f32 to vector<2x256xf32>
    %134 = arith.select %50, %132, %133 : vector<2x256xi1>, vector<2x256xf32>
    %135 = arith.maximumf %131, %134 : vector<2x256xf32>
    %c224_i32_40 = arith.constant 224 : i32
    %136 = tpu.dynamic_rotate %127 by %c224_i32_40 dim 1 : vector<2x256xf32>, i32 -> vector<2x256xf32>
    %cst_41 = arith.constant -3.000000e+38 : f32
    %137 = vector.broadcast %cst_41 : f32 to vector<2x256xf32>
    %138 = arith.select %48, %136, %137 : vector<2x256xi1>, vector<2x256xf32>
    %139 = arith.maximumf %135, %138 : vector<2x256xf32>
    %c32_i32_42 = arith.constant 32 : i32
    %140 = tpu.dynamic_rotate %127 by %c32_i32_42 dim 1 : vector<2x256xf32>, i32 -> vector<2x256xf32>
    %cst_43 = arith.constant -3.000000e+38 : f32
    %141 = vector.broadcast %cst_43 : f32 to vector<2x256xf32>
    %142 = arith.select %52, %140, %141 : vector<2x256xi1>, vector<2x256xf32>
    %143 = arith.maximumf %139, %142 : vector<2x256xf32>
    %144 = vector.extract_strided_slice %5 {offsets = [2, 0, 0], sizes = [1, 4, 1], strides = [1, 1, 1]} : vector<4x4x2xf32> to vector<1x4x1xf32>
    %145 = vector.shape_cast %144 : vector<1x4x1xf32> to vector<4x1xf32>
    %146 = vector.extract_strided_slice %143 {offsets = [0, 0], sizes = [1, 256], strides = [1, 1]} : vector<2x256xf32> to vector<1x256xf32>
    %147 = vector.broadcast %145 : vector<4x1xf32> to vector<4x256xf32>
    %148 = vector.broadcast %146 : vector<1x256xf32> to vector<4x256xf32>
    %149 = arith.mulf %147, %148 : vector<4x256xf32>
    %150 = vector.extract_strided_slice %5 {offsets = [2, 0, 1], sizes = [1, 4, 1], strides = [1, 1, 1]} : vector<4x4x2xf32> to vector<1x4x1xf32>
    %151 = vector.shape_cast %150 : vector<1x4x1xf32> to vector<4x1xf32>
    %152 = vector.extract_strided_slice %143 {offsets = [1, 0], sizes = [1, 256], strides = [1, 1]} : vector<2x256xf32> to vector<1x256xf32>
    %153 = vector.broadcast %151 : vector<4x1xf32> to vector<4x256xf32>
    %154 = vector.broadcast %152 : vector<1x256xf32> to vector<4x256xf32>
    %155 = arith.mulf %153, %154 : vector<4x256xf32>
    %156 = arith.addf %149, %155 : vector<4x256xf32>
    %157 = arith.addf %111, %156 : vector<4x256xf32>
    %c255_i32_44 = arith.constant 255 : i32
    %158 = tpu.dynamic_rotate %143 by %c255_i32_44 dim 1 : vector<2x256xf32>, i32 -> vector<2x256xf32>
    %cst_45 = arith.constant -3.000000e+38 : f32
    %159 = vector.broadcast %cst_45 : f32 to vector<2x256xf32>
    %160 = arith.select %38, %158, %159 : vector<2x256xi1>, vector<2x256xf32>
    %161 = arith.maximumf %143, %160 : vector<2x256xf32>
    %c1_i32_46 = arith.constant 1 : i32
    %162 = tpu.dynamic_rotate %143 by %c1_i32_46 dim 1 : vector<2x256xf32>, i32 -> vector<2x256xf32>
    %cst_47 = arith.constant -3.000000e+38 : f32
    %163 = vector.broadcast %cst_47 : f32 to vector<2x256xf32>
    %164 = arith.select %42, %162, %163 : vector<2x256xi1>, vector<2x256xf32>
    %165 = arith.maximumf %161, %164 : vector<2x256xf32>
    %c254_i32_48 = arith.constant 254 : i32
    %166 = tpu.dynamic_rotate %143 by %c254_i32_48 dim 1 : vector<2x256xf32>, i32 -> vector<2x256xf32>
    %cst_49 = arith.constant -3.000000e+38 : f32
    %167 = vector.broadcast %cst_49 : f32 to vector<2x256xf32>
    %168 = arith.select %40, %166, %167 : vector<2x256xi1>, vector<2x256xf32>
    %169 = arith.maximumf %165, %168 : vector<2x256xf32>
    %c2_i32_50 = arith.constant 2 : i32
    %170 = tpu.dynamic_rotate %143 by %c2_i32_50 dim 1 : vector<2x256xf32>, i32 -> vector<2x256xf32>
    %cst_51 = arith.constant -3.000000e+38 : f32
    %171 = vector.broadcast %cst_51 : f32 to vector<2x256xf32>
    %172 = arith.select %44, %170, %171 : vector<2x256xi1>, vector<2x256xf32>
    %173 = arith.maximumf %169, %172 : vector<2x256xf32>
    %c240_i32_52 = arith.constant 240 : i32
    %174 = tpu.dynamic_rotate %173 by %c240_i32_52 dim 1 : vector<2x256xf32>, i32 -> vector<2x256xf32>
    %cst_53 = arith.constant -3.000000e+38 : f32
    %175 = vector.broadcast %cst_53 : f32 to vector<2x256xf32>
    %176 = arith.select %46, %174, %175 : vector<2x256xi1>, vector<2x256xf32>
    %177 = arith.maximumf %173, %176 : vector<2x256xf32>
    %c16_i32_54 = arith.constant 16 : i32
    %178 = tpu.dynamic_rotate %173 by %c16_i32_54 dim 1 : vector<2x256xf32>, i32 -> vector<2x256xf32>
    %cst_55 = arith.constant -3.000000e+38 : f32
    %179 = vector.broadcast %cst_55 : f32 to vector<2x256xf32>
    %180 = arith.select %50, %178, %179 : vector<2x256xi1>, vector<2x256xf32>
    %181 = arith.maximumf %177, %180 : vector<2x256xf32>
    %c224_i32_56 = arith.constant 224 : i32
    %182 = tpu.dynamic_rotate %173 by %c224_i32_56 dim 1 : vector<2x256xf32>, i32 -> vector<2x256xf32>
    %cst_57 = arith.constant -3.000000e+38 : f32
    %183 = vector.broadcast %cst_57 : f32 to vector<2x256xf32>
    %184 = arith.select %48, %182, %183 : vector<2x256xi1>, vector<2x256xf32>
    %185 = arith.maximumf %181, %184 : vector<2x256xf32>
    %c32_i32_58 = arith.constant 32 : i32
    %186 = tpu.dynamic_rotate %173 by %c32_i32_58 dim 1 : vector<2x256xf32>, i32 -> vector<2x256xf32>
    %cst_59 = arith.constant -3.000000e+38 : f32
    %187 = vector.broadcast %cst_59 : f32 to vector<2x256xf32>
    %188 = arith.select %52, %186, %187 : vector<2x256xi1>, vector<2x256xf32>
    %189 = arith.maximumf %185, %188 : vector<2x256xf32>
    %190 = vector.extract_strided_slice %5 {offsets = [3, 0, 0], sizes = [1, 4, 1], strides = [1, 1, 1]} : vector<4x4x2xf32> to vector<1x4x1xf32>
    %191 = vector.shape_cast %190 : vector<1x4x1xf32> to vector<4x1xf32>
    %192 = vector.extract_strided_slice %189 {offsets = [0, 0], sizes = [1, 256], strides = [1, 1]} : vector<2x256xf32> to vector<1x256xf32>
    %193 = vector.broadcast %191 : vector<4x1xf32> to vector<4x256xf32>
    %194 = vector.broadcast %192 : vector<1x256xf32> to vector<4x256xf32>
    %195 = arith.mulf %193, %194 : vector<4x256xf32>
    %196 = vector.extract_strided_slice %5 {offsets = [3, 0, 1], sizes = [1, 4, 1], strides = [1, 1, 1]} : vector<4x4x2xf32> to vector<1x4x1xf32>
    %197 = vector.shape_cast %196 : vector<1x4x1xf32> to vector<4x1xf32>
    %198 = vector.extract_strided_slice %189 {offsets = [1, 0], sizes = [1, 256], strides = [1, 1]} : vector<2x256xf32> to vector<1x256xf32>
    %199 = vector.broadcast %197 : vector<4x1xf32> to vector<4x256xf32>
    %200 = vector.broadcast %198 : vector<1x256xf32> to vector<4x256xf32>
    %201 = arith.mulf %199, %200 : vector<4x256xf32>
    %202 = arith.addf %195, %201 : vector<4x256xf32>
    %203 = arith.addf %157, %202 : vector<4x256xf32>
    %c0_60 = arith.constant 0 : index
    %c0_61 = arith.constant 0 : index
    %204 = vector.load %arg7[%c0_60, %c0_61] : memref<4x1xf32, #tpu.memory_space<vmem>>, vector<4x1xf32>
    %205 = vector.broadcast %204 : vector<4x1xf32> to vector<4x256xf32>
    %206 = arith.addf %203, %205 : vector<4x256xf32>
    %cst_62 = arith.constant 0.000000e+00 : f32
    %207 = vector.broadcast %cst_62 : f32 to vector<4x256xf32>
    %208 = arith.cmpf ogt, %206, %207 : vector<4x256xf32>
    %cst_63 = arith.constant 1.000000e-01 : f32
    %209 = vector.broadcast %cst_63 : f32 to vector<4x256xf32>
    %210 = arith.mulf %209, %206 : vector<4x256xf32>
    %211 = arith.select %208, %206, %210 : vector<4x256xi1>, vector<4x256xf32>
    %c0_64 = arith.constant 0 : index
    %c0_65 = arith.constant 0 : index
    %c0_66 = arith.constant 0 : index
    %212 = vector.load %arg8[%c0_64, %c0_65, %c0_66] : memref<1x4x256xf32, #tpu.memory_space<vmem>>, vector<1x4x256xf32>
    %213 = vector.shape_cast %212 : vector<1x4x256xf32> to vector<4x256xf32>
    %214 = vector.shape_cast %211 : vector<4x256xf32> to vector<1x4x256xf32>
    tpu.vector_store %arg8[%c0_64, %c0_65, %c0_66], %214 {strides = array<i32>} : memref<1x4x256xf32, #tpu.memory_space<vmem>>, vector<1x4x256xf32>,
    return
  }
  func.func @transform_0(%arg0: i32) -> (i32, i32) {
    %c0_i32 = arith.constant 0 : i32
    %c0_i32_0 = arith.constant 0 : i32
    %c0_i32_1 = arith.constant 0 : i32
    return %c0_i32, %c0_i32_0 : i32, i32
  }
  func.func @transform_1(%arg0: i32) -> (i32, i32) {
    %c0_i32 = arith.constant 0 : i32
    %c0_i32_0 = arith.constant 0 : i32
    %c0_i32_1 = arith.constant 0 : i32
    return %c0_i32, %c0_i32_0 : i32, i32
  }
  func.func @transform_2(%arg0: i32) -> (i32, i32, i32) {
    %c0_i32 = arith.constant 0 : i32
    %c0_i32_0 = arith.constant 0 : i32
    %c0_i32_1 = arith.constant 0 : i32
    return %arg0, %c0_i32, %c0_i32_0 : i32, i32, i32
  }
  func.func @transform_3(%arg0: i32) -> (i32, i32) {
    %c0_i32 = arith.constant 0 : i32
    %c0_i32_0 = arith.constant 0 : i32
    %c0_i32_1 = arith.constant 0 : i32
    return %c0_i32, %c0_i32_0 : i32, i32
  }
  func.func @transform_4(%arg0: i32) -> (i32, i32) {
    %c0_i32 = arith.constant 0 : i32
    %c0_i32_0 = arith.constant 0 : i32
    %c0_i32_1 = arith.constant 0 : i32
    return %c0_i32, %c0_i32_0 : i32, i32
  }
  func.func @transform_5(%arg0: i32) -> (i32, i32, i32) {
    %c0_i32 = arith.constant 0 : i32
    %c0_i32_0 = arith.constant 0 : i32
    %c0_i32_1 = arith.constant 0 : i32
    %c0_i32_2 = arith.constant 0 : i32
    return %c0_i32, %c0_i32_0, %c0_i32_1 : i32, i32, i32
  }
  func.func @transform_6(%arg0: i32) -> (i32, i32) {
    %c0_i32 = arith.constant 0 : i32
    %c0_i32_0 = arith.constant 0 : i32
    %c0_i32_1 = arith.constant 0 : i32
    return %c0_i32, %c0_i32_0 : i32, i32
  }
  func.func @transform_7(%arg0: i32) -> (i32, i32, i32) {
    %c0_i32 = arith.constant 0 : i32
    %c0_i32_0 = arith.constant 0 : i32
    %c0_i32_1 = arith.constant 0 : i32
    return %arg0, %c0_i32, %c0_i32_0 : i32, i32, i32
  }
}

</mosaic_0001>

<llo_original>
// kernel: tpu_custom_call.1
$region0: #{tpu_custom_call.1}
  #allocation0 [shape = 'u32[]', space=smem, size = 0x4, offset = 0x4, fixed_abs, tag = 'smem constant byte address 0x4 - core index']
  #allocation1 [shape = 'u32[72,128]{1,0:T(1,128)}', space=vmem, size = 0x9000, scoped, tag = 'internal scratch']
  %s0 = inlined_call_operand.vmem [shape: s32[2,256], index: 0, kind: input, shape index: {}]
  %s1 = inlined_call_operand.vmem [shape: s32[2,256], index: 1, kind: input, shape index: {}]
  %s2 = inlined_call_operand.vmem [shape: f32[2,4,256], index: 2, kind: input, shape index: {}]
  %s3 = inlined_call_operand.vmem [shape: f32[2,4], index: 3, kind: input, shape index: {}]
  %s4 = inlined_call_operand.vmem [shape: f32[2,1], index: 4, kind: input, shape index: {}]
  %s5 = inlined_call_operand.vmem [shape: f32[4,4,2], index: 5, kind: input, shape index: {}]
  %s6 = inlined_call_operand.vmem [shape: f32[4,1], index: 6, kind: input, shape index: {}]
  %s7 = inlined_call_operand.hbm [shape: f32[2,4,256], index: 7, kind: output, shape index: {}]
  %s8 = sld [smem:[#allocation0]]
  $region61: #{tpu_custom_call.1} parent=0
    _
  %s10 = ssub.s32 1, %s8
  %s11 = scalar_select 0, %s10, %s8
  $region1: #{tpu_custom_call.1} parent=0
    #allocation2 [shape = 'u8[8192]{0}', space=vmem, size = 0x2000, scoped, tag = 'output window, operand 0']
    #allocation3 [shape = 's32[2]{0}', space=sflag, size = 0x8, scoped, tag = 'scoped memory for tpu_custom_call.1']
    %12 = vsyncpa [#allocation3], 0
    %s13 = scalar_lea.sflag [#allocation3], 1
    %14 = vsyncpa %s13, 0
    loop: start=0, step=1, limit=4
    $region2: #{tpu_custom_call.1} parent=1 // loop_pre_header
      _
    $region3: #{tpu_custom_call.1} parent=1 // loop_header
      %s16 = sphi 0, %s20
      %p17 = scmp.ge.s32.totalorder %s16, 4
      %s24 = sphi 0, %s24
      %s26 = sphi 0, %s24
      %s27 = sphi 0, %s26
      %s41 = sphi 0, %s27
      %s45 = sphi 0, %s45
      %s47 = sphi 0, %s45
      %s48 = sphi 0, %s47
      %s62 = sphi 0, %s48
      %s68 = sphi 0, %s70
      %s71 = sphi 0, %s68
      %s72 = sphi 0, %s71
      %s88 = sphi 0, %s72
      %s92 = sphi 0, %s92
      %s94 = sphi 0, %s92
      %s95 = sphi 0, %s94
      %s109 = sphi 0, %s95
      %s113 = sphi 0, %s113
      %s115 = sphi 0, %s113
      %s116 = sphi 0, %s115
      %s130 = sphi 0, %s116
      %s134 = sphi 0, %s134
      %s136 = sphi 0, %s134
      %s137 = sphi 0, %s136
      %s151 = sphi 0, %s137
      %s155 = sphi 0, %s155
      %s157 = sphi 0, %s155
      %s158 = sphi 0, %s157
      %s172 = sphi 0, %s158
      %s178 = sphi 0, %s180
      %s181 = sphi 0, %s178
      %s182 = sphi 0, %s181
      %s198 = sphi 0, %s182
    $region4: #{tpu_custom_call.1} parent=1 // loop_header_branch
      %19 = sbr.rel (%p17) target = $region8
    $region5: #{tpu_custom_call.1} parent=1 // loop_body
      %s21 = ssub.s32 %s16, 1
      %s22 = ssub.s32 %s16, 2
      %s23 = sadd.s32 %s16, 1
      %s25 = sadd.s32 %s24, 1
      %p28 = scmp.eq.s32.totalorder %s16, 1
      %p29 = scmp.ne.s32.totalorder %s24, %s26
      %p30 = scmp.eq.s32.totalorder %s16, 0
      %p31 = por %p29, %p30
      %p32 = scmp.ne.s32.totalorder %s24, %s26
      %p33 = scmp.eq.s32.totalorder %s21, 1
      %p34 = por %p32, %p33
      %p35 = scmp.ne.s32.totalorder %s26, %s27
      %p36 = scmp.eq.s32.totalorder %s21, 0
      %p37 = por %p35, %p36
      %p38 = scmp.ne.s32.totalorder %s26, %s27
      %p39 = scmp.eq.s32.totalorder %s22, 1
      %p40 = por %p38, %p39
      %p42 = scmp.ne.s32.totalorder %s27, %s41
      %p43 = scmp.eq.s32.totalorder %s22, 0
      %p44 = por %p42, %p43
      %s46 = sadd.s32 %s45, 1
      %p49 = scmp.eq.s32.totalorder %s16, 1
      %p50 = scmp.ne.s32.totalorder %s45, %s47
      %p51 = scmp.eq.s32.totalorder %s16, 0
      %p52 = por %p50, %p51
      %p53 = scmp.ne.s32.totalorder %s45, %s47
      %p54 = scmp.eq.s32.totalorder %s21, 1
      %p55 = por %p53, %p54
      %p56 = scmp.ne.s32.totalorder %s47, %s48
      %p57 = scmp.eq.s32.totalorder %s21, 0
      %p58 = por %p56, %p57
      %p59 = scmp.ne.s32.totalorder %s47, %s48
      %p60 = scmp.eq.s32.totalorder %s22, 1
      %p61 = por %p59, %p60
      %p63 = scmp.ne.s32.totalorder %s48, %s62
      %p64 = scmp.eq.s32.totalorder %s22, 0
      %p65 = por %p63, %p64
      %s66 = ssub.s32 %s16, %s23
      %p67 = scmp.eq.s32.totalorder %s66, 0
      %s69 = sadd.s32 %s68, 1
      %s70 = scalar_select %p67, %s68, %s69
      %p73 = pneg %p67
      %p74 = scmp.eq.s32.totalorder %s16, 1
      %p75 = por %p73, %p74
      %p76 = scmp.ne.s32.totalorder %s68, %s71
      %p77 = scmp.eq.s32.totalorder %s16, 0
      %p78 = por %p76, %p77
      %p79 = scmp.ne.s32.totalorder %s68, %s71
      %p80 = scmp.eq.s32.totalorder %s21, 1
      %p81 = por %p79, %p80
      %p82 = scmp.ne.s32.totalorder %s71, %s72
      %p83 = scmp.eq.s32.totalorder %s21, 0
      %p84 = por %p82, %p83
      %p85 = scmp.ne.s32.totalorder %s71, %s72
      %p86 = scmp.eq.s32.totalorder %s22, 1
      %p87 = por %p85, %p86
      %p89 = scmp.ne.s32.totalorder %s72, %s88
      %p90 = scmp.eq.s32.totalorder %s22, 0
      %p91 = por %p89, %p90
      %s93 = sadd.s32 %s92, 1
      %p96 = scmp.eq.s32.totalorder %s16, 1
      %p97 = scmp.ne.s32.totalorder %s92, %s94
      %p98 = scmp.eq.s32.totalorder %s16, 0
      %p99 = por %p97, %p98
      %p100 = scmp.ne.s32.totalorder %s92, %s94
      %p101 = scmp.eq.s32.totalorder %s21, 1
      %p102 = por %p100, %p101
      %p103 = scmp.ne.s32.totalorder %s94, %s95
      %p104 = scmp.eq.s32.totalorder %s21, 0
      %p105 = por %p103, %p104
      %p106 = scmp.ne.s32.totalorder %s94, %s95
      %p107 = scmp.eq.s32.totalorder %s22, 1
      %p108 = por %p106, %p107
      %p110 = scmp.ne.s32.totalorder %s95, %s109
      %p111 = scmp.eq.s32.totalorder %s22, 0
      %p112 = por %p110, %p111
      %s114 = sadd.s32 %s113, 1
      %p117 = scmp.eq.s32.totalorder %s16, 1
      %p118 = scmp.ne.s32.totalorder %s113, %s115
      %p119 = scmp.eq.s32.totalorder %s16, 0
      %p120 = por %p118, %p119
      %p121 = scmp.ne.s32.totalorder %s113, %s115
      %p122 = scmp.eq.s32.totalorder %s21, 1
      %p123 = por %p121, %p122
      %p124 = scmp.ne.s32.totalorder %s115, %s116
      %p125 = scmp.eq.s32.totalorder %s21, 0
      %p126 = por %p124, %p125
      %p127 = scmp.ne.s32.totalorder %s115, %s116
      %p128 = scmp.eq.s32.totalorder %s22, 1
      %p129 = por %p127, %p128
      %p131 = scmp.ne.s32.totalorder %s116, %s130
      %p132 = scmp.eq.s32.totalorder %s22, 0
      %p133 = por %p131, %p132
      %s135 = sadd.s32 %s134, 1
      %p138 = scmp.eq.s32.totalorder %s16, 1
      %p139 = scmp.ne.s32.totalorder %s134, %s136
      %p140 = scmp.eq.s32.totalorder %s16, 0
      %p141 = por %p139, %p140
      %p142 = scmp.ne.s32.totalorder %s134, %s136
      %p143 = scmp.eq.s32.totalorder %s21, 1
      %p144 = por %p142, %p143
      %p145 = scmp.ne.s32.totalorder %s136, %s137
      %p146 = scmp.eq.s32.totalorder %s21, 0
      %p147 = por %p145, %p146
      %p148 = scmp.ne.s32.totalorder %s136, %s137
      %p149 = scmp.eq.s32.totalorder %s22, 1
      %p150 = por %p148, %p149
      %p152 = scmp.ne.s32.totalorder %s137, %s151
      %p153 = scmp.eq.s32.totalorder %s22, 0
      %p154 = por %p152, %p153
      %s156 = sadd.s32 %s155, 1
      %p159 = scmp.eq.s32.totalorder %s16, 1
      %p160 = scmp.ne.s32.totalorder %s155, %s157
      %p161 = scmp.eq.s32.totalorder %s16, 0
      %p162 = por %p160, %p161
      %p163 = scmp.ne.s32.totalorder %s155, %s157
      %p164 = scmp.eq.s32.totalorder %s21, 1
      %p165 = por %p163, %p164
      %p166 = scmp.ne.s32.totalorder %s157, %s158
      %p167 = scmp.eq.s32.totalorder %s21, 0
      %p168 = por %p166, %p167
      %p169 = scmp.ne.s32.totalorder %s157, %s158
      %p170 = scmp.eq.s32.totalorder %s22, 1
      %p171 = por %p169, %p170
      %p173 = scmp.ne.s32.totalorder %s158, %s172
      %p174 = scmp.eq.s32.totalorder %s22, 0
      %p175 = por %p173, %p174
      %s176 = ssub.s32 %s16, %s23
      %p177 = scmp.eq.s32.totalorder %s176, 0
      %s179 = sadd.s32 %s178, 1
      %s180 = scalar_select %p177, %s178, %s179
      %p183 = pneg %p177
      %p184 = scmp.eq.s32.totalorder %s16, 1
      %p185 = por %p183, %p184
      %p186 = scmp.ne.s32.totalorder %s178, %s181
      %p187 = scmp.eq.s32.totalorder %s16, 0
      %p188 = por %p186, %p187
      %p189 = scmp.ne.s32.totalorder %s178, %s181
      %p190 = scmp.eq.s32.totalorder %s21, 1
      %p191 = por %p189, %p190
      %p192 = scmp.ne.s32.totalorder %s181, %s182
      %p193 = scmp.eq.s32.totalorder %s21, 0
      %p194 = por %p192, %p193
      %p195 = scmp.ne.s32.totalorder %s181, %s182
      %p196 = scmp.eq.s32.totalorder %s22, 1
      %p197 = por %p195, %p196
      %p199 = scmp.ne.s32.totalorder %s182, %s198
      %p200 = scmp.eq.s32.totalorder %s22, 0
      %p201 = por %p199, %p200
      %p202 = scmp.le.s32.totalorder 1, %s16
      %p203 = scmp.lt.s32.totalorder %s16, 3
      %p204 = pnand %p202, %p203
      %p205 = pneg %p204
      // Predicated region
      $region9: #{tpu_custom_call.1} parent=5 // pred_check
        _
      $region10: #{tpu_custom_call.1} parent=5 // pred_check_branch
        %207 = sbr.rel (%p204) target = $region12
      $region11: #{tpu_custom_call.1} parent=5 // pred_region
        %s208 = ssub.s32 %s16, 1
        // Predicated region
        $region13: #{tpu_custom_call.1} parent=11 // pred_check
          %p209 = pneg %p37
        $region14: #{tpu_custom_call.1} parent=11 // pred_check_branch
          %211 = sbr.rel (%p209) target = $region16
        $region15: #{tpu_custom_call.1} parent=11 // pred_region
          _
        $region16: #{tpu_custom_call.1} parent=11 // pred_fallthru
          _
        // Predicated region
        $region17: #{tpu_custom_call.1} parent=11 // pred_check
          %p212 = pneg %p58
        $region18: #{tpu_custom_call.1} parent=11 // pred_check_branch
          %214 = sbr.rel (%p212) target = $region20
        $region19: #{tpu_custom_call.1} parent=11 // pred_region
          _
        $region20: #{tpu_custom_call.1} parent=11 // pred_fallthru
          _
        // Predicated region
        $region21: #{tpu_custom_call.1} parent=11 // pred_check
          %p215 = pneg %p105
        $region22: #{tpu_custom_call.1} parent=11 // pred_check_branch
          %217 = sbr.rel (%p215) target = $region24
        $region23: #{tpu_custom_call.1} parent=11 // pred_region
          _
        $region24: #{tpu_custom_call.1} parent=11 // pred_fallthru
          _
        // Predicated region
        $region25: #{tpu_custom_call.1} parent=11 // pred_check
          %p218 = pneg %p126
        $region26: #{tpu_custom_call.1} parent=11 // pred_check_branch
          %220 = sbr.rel (%p218) target = $region28
        $region27: #{tpu_custom_call.1} parent=11 // pred_region
          _
        $region28: #{tpu_custom_call.1} parent=11 // pred_fallthru
          _
        // Predicated region
        $region29: #{tpu_custom_call.1} parent=11 // pred_check
          %p221 = pneg %p147
        $region30: #{tpu_custom_call.1} parent=11 // pred_check_branch
          %223 = sbr.rel (%p221) target = $region32
        $region31: #{tpu_custom_call.1} parent=11 // pred_region
          _
        $region32: #{tpu_custom_call.1} parent=11 // pred_fallthru
          _
        // Predicated region
        $region33: #{tpu_custom_call.1} parent=11 // pred_check
          %p224 = pneg %p168
        $region34: #{tpu_custom_call.1} parent=11 // pred_check_branch
          %226 = sbr.rel (%p224) target = $region36
        $region35: #{tpu_custom_call.1} parent=11 // pred_region
          _
        $region36: #{tpu_custom_call.1} parent=11 // pred_fallthru
          _
      $region12: #{tpu_custom_call.1} parent=5 // pred_fallthru
        _
      %p227 = scmp.lt.s32.totalorder %s16, 2
      // Predicated region
      $region37: #{tpu_custom_call.1} parent=5 // pred_check
        %p228 = pneg %p227
      $region38: #{tpu_custom_call.1} parent=5 // pred_check_branch
        %230 = sbr.rel (%p228) target = $region40
      $region39: #{tpu_custom_call.1} parent=5 // pred_region
        // Predicated region
        $region41: #{tpu_custom_call.1} parent=39 // pred_check
          %p231 = pneg %p78
        $region42: #{tpu_custom_call.1} parent=39 // pred_check_branch
          %233 = sbr.rel (%p231) target = $region44
        $region43: #{tpu_custom_call.1} parent=39 // pred_region
          %p234 = scmp.lt.s32.totalorder %s16, 1
          %s235 = scalar_select %p234, %s16, 1
          %s236 = smul.addr %s235, 2
          %s237 = smul.addr %s236, 4
          %s238 = scalar_lea.vmem %s2, %s237
        $region44: #{tpu_custom_call.1} parent=39 // pred_fallthru
          _
      $region40: #{tpu_custom_call.1} parent=5 // pred_fallthru
        _
      %p239 = scmp.le.s32.totalorder 1, %s16
      %p240 = scmp.lt.s32.totalorder %s16, 3
      %p241 = pnand %p239, %p240
      %p242 = pneg %p241
      // Predicated region
      $region45: #{tpu_custom_call.1} parent=5 // pred_check
        _
      $region46: #{tpu_custom_call.1} parent=5 // pred_check_branch
        %244 = sbr.rel (%p241) target = $region48
      $region47: #{tpu_custom_call.1} parent=5 // pred_region
        %s245 = ssub.s32 %s16, 1
        %p246 = pneg %p37
        %p247 = pneg %p34
        %p248 = pneg %p58
        %p249 = pneg %p55
        %p250 = scmp.lt.s32.totalorder %s21, 1
        %s251 = scalar_select %p250, %s21, 1
        %s252 = smul.addr %s251, 2
        %s253 = smul.addr %s252, 4
        %s254 = scalar_lea.vmem %s2, %s253
        %p255 = pneg %p84
        %p256 = pneg %p81
        %p257 = pneg %p105
        %p258 = pneg %p102
        %p259 = pneg %p126
        %p260 = pneg %p123
        %p261 = pneg %p147
        %p262 = pneg %p144
        %p263 = pneg %p168
        %p264 = pneg %p165
        %p265 = pneg %p194
        %p266 = pneg %p191
        %s267 = sand.u32 %s181, 1
        %s268 = scalar_lea.sflag [#allocation3], %s267
        %s269 = sand.u32 %s181, 1
        %s270 = smul.addr %s269, 8
        %s271 = scalar_lea.vmem [#allocation2], %s270
        %p272 = scmp.lt.s32.totalorder %s21, 1
        %s273 = scalar_select %p272, %s21, 1
        %s274 = smul.addr %s273, 2
        %s275 = smul.addr %s274, 4
        %s276 = scalar_lea.vmem %s2, %s275
        %v277 = vld [vmem:[%s0] sm:$0xf]
        %v278 = vld [vmem:[%s1] sm:$0xf]
        %v279 = vld [vmem:[%s276] sm:$0xff]
        %v280 = vld [vmem:[%s3] sm:$0x3]
        %v281 = vld [vmem:[%s5] sm:$0xf]
        %v282 = vld [vmem:[%s5 + $0x4] sm:$0xf]
        %v283 = vld [vmem:[%s5 + $0x8] sm:$0xf]
        %v284 = vld [vmem:[%s5 + $0xc] sm:$0xf]
        %286 = vset.pattern.permute.xlu0 0
        %287 = vperm.xlu0 %286, %v280
        %v288 = vpop.permute.xlu0 %287
        %v291 = vperm.slane %v279, 0
        %v292 = vperm.slane %v279, 4
        %v295 = vperm.slane %v291, 0
        %v296 = vperm.slane %v292, 0
        %v297 = vmul.f32 %v288, %v295
        %v298 = vmul.f32 %v288, %v296
        %299 = vset.pattern.permute.xlu0 1
        %300 = vperm.xlu0 %299, %v280
        %v301 = vpop.permute.xlu0 %300
        %v303 = vperm.slane %v279, 1
        %v304 = vperm.slane %v279, 5
        %v307 = vperm.slane %v303, 1
        %v308 = vperm.slane %v304, 1
        %v309 = vmul.f32 %v301, %v307
        %v310 = vmul.f32 %v301, %v308
        %v311 = vadd.f32 %v297, %v309
        %v312 = vadd.f32 %v298, %v310
        %313 = vset.pattern.permute.xlu0 2
        %314 = vperm.xlu0 %313, %v280
        %v315 = vpop.permute.xlu0 %314
        %v317 = vperm.slane %v279, 2
        %v318 = vperm.slane %v279, 6
        %v321 = vperm.slane %v317, 2
        %v322 = vperm.slane %v318, 2
        %v323 = vmul.f32 %v315, %v321
        %v324 = vmul.f32 %v315, %v322
        %v325 = vadd.f32 %v311, %v323
        %v326 = vadd.f32 %v312, %v324
        %327 = vset.pattern.permute.xlu0 3
        %328 = vperm.xlu0 %327, %v280
        %v329 = vpop.permute.xlu0 %328
        %v331 = vperm.slane %v279, 3
        %v332 = vperm.slane %v279, 7
        %v335 = vperm.slane %v331, 3
        %v336 = vperm.slane %v332, 3
        %v337 = vmul.f32 %v329, %v335
        %v338 = vmul.f32 %v329, %v336
        %v339 = vadd.f32 %v325, %v337
        %v340 = vadd.f32 %v326, %v338
        %v341 = vld [vmem:[%s4] sm:$0x3]
        %343 = vset.pattern.permute.xlu0 0
        %344 = vperm.xlu0 %343, %v341
        %v345 = vpop.permute.xlu0 %344
        %v347 = vadd.f32 %v339, %v345
        %v348 = vadd.f32 %v340, %v345
        %vm349 = vcmp.gt.f32.partialorder %v347, 0.0
        %vm350 = vcmp.gt.f32.partialorder %v348, 0.0
        %v351 = vmul.f32 %v347, 0.1
        %v352 = vmul.f32 %v348, 0.1
        %v353 = vsel %vm349, %v347, %v351
        %v354 = vsel %vm350, %v348, %v352
        %vm355 = vcmp.lt.s32.totalorder %v277, 15
        %vm356 = vcmp.lt.s32.totalorder %v277, 14
        %vm357 = vcmp.ge.s32.totalorder %v277, 1
        %vm358 = vcmp.ge.s32.totalorder %v277, 2
        %vm359 = vcmp.lt.s32.totalorder %v278, 15
        %vm360 = vcmp.lt.s32.totalorder %v278, 14
        %vm361 = vcmp.ge.s32.totalorder %v278, 1
        %vm362 = vcmp.ge.s32.totalorder %v278, 2
        %364 = vset.pattern.permute.xlu0 0
        %365 = vperm.xlu0 %364, %v281
        %v366 = vpop.permute.xlu0 %365
        %v368 = vperm.slane %v353, 0
        %v369 = vperm.slane %v354, 0
        %v370 = vmul.f32 %v366, %v368
        %v371 = vmul.f32 %v366, %v369
        %372 = vset.pattern.permute.xlu0 1
        %373 = vperm.xlu0 %372, %v281
        %v374 = vpop.permute.xlu0 %373
        %v376 = vperm.slane %v353, 1
        %v377 = vperm.slane %v354, 1
        %v378 = vmul.f32 %v374, %v376
        %v379 = vmul.f32 %v374, %v377
        %v380 = vadd.f32 %v370, %v378
        %v381 = vadd.f32 %v371, %v379
        %382 = vrot.lane.b32.xlu0 %v353, 127
        %v383 = vpop.permute.xlu0 %382
        %384 = vrot.lane.b32.xlu0 %v354, 127
        %v385 = vpop.permute.xlu0 %384
        %v386 = vlaneseq
        %v387 = vand.u32 %v386, 127
        %vm388 = vcmp.lt.s32.totalorder %v387, 127
        %v389 = vsel %vm388, %v383, %v385
        %v390 = vsel %vm388, %v385, %v383
        %v393 = vrot.slane %v390, 6
        %vm394 = vcmask 1041408
        %v395 = vsel %vm394, %v389, %v393
        %v397 = vsel %vm355, %v395, -3e+38
        %399 = vst [vmem:[#allocation1] ss:$4 sm:$0xff] %v397
        %v400 = vld.sshfl [vmem:[#allocation1] sm:$0xff pattern:$0x73625140]
        %v401 = vld.sshfl [vmem:[#allocation1 + $0x8] sm:$0xff pattern:$0x73625140]
        %v404 = vmax.f32 %v353, %v400
        %v405 = vmax.f32 %v354, %v401
        %406 = vrot.lane.b32.xlu0 %v353, 1
        %v407 = vpop.permute.xlu0 %406
        %408 = vrot.lane.b32.xlu0 %v354, 1
        %v409 = vpop.permute.xlu0 %408
        %vm410 = vcmp.lt.s32.totalorder %v387, 1
        %v411 = vsel %vm410, %v407, %v409
        %v412 = vsel %vm410, %v409, %v407
        %v415 = vrot.slane %v411, 6
        %v416 = vsel %vm394, %v412, %v415
        %v418 = vsel %vm357, %v416, -3e+38
        %420 = vst [vmem:[#allocation1] ss:$4 sm:$0xff] %v418
        %v421 = vld.sshfl [vmem:[#allocation1] sm:$0xff pattern:$0x73625140]
        %v422 = vld.sshfl [vmem:[#allocation1 + $0x8] sm:$0xff pattern:$0x73625140]
        %v425 = vmax.f32 %v404, %v421
        %v426 = vmax.f32 %v405, %v422
        %427 = vrot.lane.b32.xlu0 %v353, 126
        %v428 = vpop.permute.xlu0 %427
        %429 = vrot.lane.b32.xlu0 %v354, 126
        %v430 = vpop.permute.xlu0 %429
        %vm431 = vcmp.lt.s32.totalorder %v387, 126
        %v432 = vsel %vm431, %v428, %v430
        %v433 = vsel %vm431, %v430, %v428
        %v436 = vrot.slane %v433, 6
        %v437 = vsel %vm394, %v432, %v436
        %v439 = vsel %vm356, %v437, -3e+38
        %441 = vst [vmem:[#allocation1] ss:$4 sm:$0xff] %v439
        %v442 = vld.sshfl [vmem:[#allocation1] sm:$0xff pattern:$0x73625140]
        %v443 = vld.sshfl [vmem:[#allocation1 + $0x8] sm:$0xff pattern:$0x73625140]
        %v446 = vmax.f32 %v425, %v442
        %v447 = vmax.f32 %v426, %v443
        %448 = vrot.lane.b32.xlu0 %v353, 2
        %v449 = vpop.permute.xlu0 %448
        %450 = vrot.lane.b32.xlu0 %v354, 2
        %v451 = vpop.permute.xlu0 %450
        %vm452 = vcmp.lt.s32.totalorder %v387, 2
        %v453 = vsel %vm452, %v449, %v451
        %v454 = vsel %vm452, %v451, %v449
        %v457 = vrot.slane %v453, 6
        %v458 = vsel %vm394, %v454, %v457
        %v460 = vsel %vm358, %v458, -3e+38
        %462 = vst [vmem:[#allocation1] ss:$4 sm:$0xff] %v460
        %v463 = vld.sshfl [vmem:[#allocation1] sm:$0xff pattern:$0x73625140]
        %v464 = vld.sshfl [vmem:[#allocation1 + $0x8] sm:$0xff pattern:$0x73625140]
        %v467 = vmax.f32 %v446, %v463
        %v468 = vmax.f32 %v447, %v464
        %469 = vrot.lane.b32.xlu0 %v467, 112
        %v470 = vpop.permute.xlu0 %469
        %471 = vrot.lane.b32.xlu0 %v468, 112
        %v472 = vpop.permute.xlu0 %471
        %vm473 = vcmp.lt.s32.totalorder %v387, 112
        %v474 = vsel %vm473, %v470, %v472
        %v475 = vsel %vm473, %v472, %v470
        %v478 = vrot.slane %v475, 6
        %v479 = vsel %vm394, %v474, %v478
        %v481 = vsel %vm359, %v479, -3e+38
        %483 = vst [vmem:[#allocation1] ss:$4 sm:$0xff] %v481
        %v484 = vld.sshfl [vmem:[#allocation1] sm:$0xff pattern:$0x73625140]
        %v485 = vld.sshfl [vmem:[#allocation1 + $0x8] sm:$0xff pattern:$0x73625140]
        %v488 = vmax.f32 %v467, %v484
        %v489 = vmax.f32 %v468, %v485
        %490 = vrot.lane.b32.xlu0 %v467, 16
        %v491 = vpop.permute.xlu0 %490
        %492 = vrot.lane.b32.xlu0 %v468, 16
        %v493 = vpop.permute.xlu0 %492
        %vm494 = vcmp.lt.s32.totalorder %v387, 16
        %v495 = vsel %vm494, %v491, %v493
        %v496 = vsel %vm494, %v493, %v491
        %v499 = vrot.slane %v495, 6
        %v500 = vsel %vm394, %v496, %v499
        %v502 = vsel %vm361, %v500, -3e+38
        %504 = vst [vmem:[#allocation1] ss:$4 sm:$0xff] %v502
        %v505 = vld.sshfl [vmem:[#allocation1] sm:$0xff pattern:$0x73625140]
        %v506 = vld.sshfl [vmem:[#allocation1 + $0x8] sm:$0xff pattern:$0x73625140]
        %v509 = vmax.f32 %v488, %v505
        %v510 = vmax.f32 %v489, %v506
        %511 = vrot.lane.b32.xlu0 %v467, 96
        %v512 = vpop.permute.xlu0 %511
        %513 = vrot.lane.b32.xlu0 %v468, 96
        %v514 = vpop.permute.xlu0 %513
        %vm515 = vcmp.lt.s32.totalorder %v387, 96
        %v516 = vsel %vm515, %v512, %v514
        %v517 = vsel %vm515, %v514, %v512
        %v520 = vrot.slane %v517, 6
        %v521 = vsel %vm394, %v516, %v520
        %v523 = vsel %vm360, %v521, -3e+38
        %525 = vst [vmem:[#allocation1] ss:$4 sm:$0xff] %v523
        %v526 = vld.sshfl [vmem:[#allocation1] sm:$0xff pattern:$0x73625140]
        %v527 = vld.sshfl [vmem:[#allocation1 + $0x8] sm:$0xff pattern:$0x73625140]
        %v530 = vmax.f32 %v509, %v526
        %v531 = vmax.f32 %v510, %v527
        %532 = vrot.lane.b32.xlu0 %v467, 32
        %v533 = vpop.permute.xlu0 %532
        %534 = vrot.lane.b32.xlu0 %v468, 32
        %v535 = vpop.permute.xlu0 %534
        %vm536 = vcmp.lt.s32.totalorder %v387, 32
        %v537 = vsel %vm536, %v533, %v535
        %v538 = vsel %vm536, %v535, %v533
        %v541 = vrot.slane %v537, 6
        %v542 = vsel %vm394, %v538, %v541
        %v544 = vsel %vm362, %v542, -3e+38
        %546 = vst [vmem:[#allocation1] ss:$4 sm:$0xff] %v544
        %v547 = vld.sshfl [vmem:[#allocation1] sm:$0xff pattern:$0x73625140]
        %v548 = vld.sshfl [vmem:[#allocation1 + $0x8] sm:$0xff pattern:$0x73625140]
        %v551 = vmax.f32 %v530, %v547
        %v552 = vmax.f32 %v531, %v548
        %554 = vset.pattern.permute.xlu0 0
        %555 = vperm.xlu0 %554, %v282
        %v556 = vpop.permute.xlu0 %555
        %v558 = vperm.slane %v551, 0
        %v559 = vperm.slane %v552, 0
        %v560 = vmul.f32 %v556, %v558
        %v561 = vmul.f32 %v556, %v559
        %562 = vset.pattern.permute.xlu0 1
        %563 = vperm.xlu0 %562, %v282
        %v564 = vpop.permute.xlu0 %563
        %v566 = vperm.slane %v551, 1
        %v567 = vperm.slane %v552, 1
        %v568 = vmul.f32 %v564, %v566
        %v569 = vmul.f32 %v564, %v567
        %v570 = vadd.f32 %v560, %v568
        %v571 = vadd.f32 %v561, %v569
        %v572 = vadd.f32 %v380, %v570
        %v573 = vadd.f32 %v381, %v571
        %574 = vrot.lane.b32.xlu0 %v551, 127
        %v575 = vpop.permute.xlu0 %574
        %576 = vrot.lane.b32.xlu0 %v552, 127
        %v577 = vpop.permute.xlu0 %576
        %v578 = vsel %vm388, %v575, %v577
        %v579 = vsel %vm388, %v577, %v575
        %v582 = vrot.slane %v579, 6
        %v583 = vsel %vm394, %v578, %v582
        %v585 = vsel %vm355, %v583, -3e+38
        %587 = vst [vmem:[#allocation1] ss:$4 sm:$0xff] %v585
        %v588 = vld.sshfl [vmem:[#allocation1] sm:$0xff pattern:$0x73625140]
        %v589 = vld.sshfl [vmem:[#allocation1 + $0x8] sm:$0xff pattern:$0x73625140]
        %v592 = vmax.f32 %v551, %v588
        %v593 = vmax.f32 %v552, %v589
        %594 = vrot.lane.b32.xlu0 %v551, 1
        %v595 = vpop.permute.xlu0 %594
        %596 = vrot.lane.b32.xlu0 %v552, 1
        %v597 = vpop.permute.xlu0 %596
        %v598 = vsel %vm410, %v595, %v597
        %v599 = vsel %vm410, %v597, %v595
        %v602 = vrot.slane %v598, 6
        %v603 = vsel %vm394, %v599, %v602
        %v605 = vsel %vm357, %v603, -3e+38
        %607 = vst [vmem:[#allocation1] ss:$4 sm:$0xff] %v605
        %v608 = vld.sshfl [vmem:[#allocation1] sm:$0xff pattern:$0x73625140]
        %v609 = vld.sshfl [vmem:[#allocation1 + $0x8] sm:$0xff pattern:$0x73625140]
        %v612 = vmax.f32 %v592, %v608
        %v613 = vmax.f32 %v593, %v609
        %614 = vrot.lane.b32.xlu0 %v551, 126
        %v615 = vpop.permute.xlu0 %614
        %616 = vrot.lane.b32.xlu0 %v552, 126
        %v617 = vpop.permute.xlu0 %616
        %v618 = vsel %vm431, %v615, %v617
        %v619 = vsel %vm431, %v617, %v615
        %v622 = vrot.slane %v619, 6
        %v623 = vsel %vm394, %v618, %v622
        %v625 = vsel %vm356, %v623, -3e+38
        %627 = vst [vmem:[#allocation1] ss:$4 sm:$0xff] %v625
        %v628 = vld.sshfl [vmem:[#allocation1] sm:$0xff pattern:$0x73625140]
        %v629 = vld.sshfl [vmem:[#allocation1 + $0x8] sm:$0xff pattern:$0x73625140]
        %v632 = vmax.f32 %v612, %v628
        %v633 = vmax.f32 %v613, %v629
        %634 = vrot.lane.b32.xlu0 %v551, 2
        %v635 = vpop.permute.xlu0 %634
        %636 = vrot.lane.b32.xlu0 %v552, 2
        %v637 = vpop.permute.xlu0 %636
        %v638 = vsel %vm452, %v635, %v637
        %v639 = vsel %vm452, %v637, %v635
        %v642 = vrot.slane %v638, 6
        %v643 = vsel %vm394, %v639, %v642
        %v645 = vsel %vm358, %v643, -3e+38
        %647 = vst [vmem:[#allocation1] ss:$4 sm:$0xff] %v645
        %v648 = vld.sshfl [vmem:[#allocation1] sm:$0xff pattern:$0x73625140]
        %v649 = vld.sshfl [vmem:[#allocation1 + $0x8] sm:$0xff pattern:$0x73625140]
        %v652 = vmax.f32 %v632, %v648
        %v653 = vmax.f32 %v633, %v649
        %654 = vrot.lane.b32.xlu0 %v652, 112
        %v655 = vpop.permute.xlu0 %654
        %656 = vrot.lane.b32.xlu0 %v653, 112
        %v657 = vpop.permute.xlu0 %656
        %v658 = vsel %vm473, %v655, %v657
        %v659 = vsel %vm473, %v657, %v655
        %v662 = vrot.slane %v659, 6
        %v663 = vsel %vm394, %v658, %v662
        %v665 = vsel %vm359, %v663, -3e+38
        %667 = vst [vmem:[#allocation1] ss:$4 sm:$0xff] %v665
        %v668 = vld.sshfl [vmem:[#allocation1] sm:$0xff pattern:$0x73625140]
        %v669 = vld.sshfl [vmem:[#allocation1 + $0x8] sm:$0xff pattern:$0x73625140]
        %v672 = vmax.f32 %v652, %v668
        %v673 = vmax.f32 %v653, %v669
        %674 = vrot.lane.b32.xlu0 %v652, 16
        %v675 = vpop.permute.xlu0 %674
        %676 = vrot.lane.b32.xlu0 %v653, 16
        %v677 = vpop.permute.xlu0 %676
        %v678 = vsel %vm494, %v675, %v677
        %v679 = vsel %vm494, %v677, %v675
        %v682 = vrot.slane %v678, 6
        %v683 = vsel %vm394, %v679, %v682
        %v685 = vsel %vm361, %v683, -3e+38
        %687 = vst [vmem:[#allocation1] ss:$4 sm:$0xff] %v685
        %v688 = vld.sshfl [vmem:[#allocation1] sm:$0xff pattern:$0x73625140]
        %v689 = vld.sshfl [vmem:[#allocation1 + $0x8] sm:$0xff pattern:$0x73625140]
        %v692 = vmax.f32 %v672, %v688
        %v693 = vmax.f32 %v673, %v689
        %694 = vrot.lane.b32.xlu0 %v652, 96
        %v695 = vpop.permute.xlu0 %694
        %696 = vrot.lane.b32.xlu0 %v653, 96
        %v697 = vpop.permute.xlu0 %696
        %v698 = vsel %vm515, %v695, %v697
        %v699 = vsel %vm515, %v697, %v695
        %v702 = vrot.slane %v699, 6
        %v703 = vsel %vm394, %v698, %v702
        %v705 = vsel %vm360, %v703, -3e+38
        %707 = vst [vmem:[#allocation1] ss:$4 sm:$0xff] %v705
        %v708 = vld.sshfl [vmem:[#allocation1] sm:$0xff pattern:$0x73625140]
        %v709 = vld.sshfl [vmem:[#allocation1 + $0x8] sm:$0xff pattern:$0x73625140]
        %v712 = vmax.f32 %v692, %v708
        %v713 = vmax.f32 %v693, %v709
        %714 = vrot.lane.b32.xlu0 %v652, 32
        %v715 = vpop.permute.xlu0 %714
        %716 = vrot.lane.b32.xlu0 %v653, 32
        %v717 = vpop.permute.xlu0 %716
        %v718 = vsel %vm536, %v715, %v717
        %v719 = vsel %vm536, %v717, %v715
        %v722 = vrot.slane %v718, 6
        %v723 = vsel %vm394, %v719, %v722
        %v725 = vsel %vm362, %v723, -3e+38
        %727 = vst [vmem:[#allocation1] ss:$4 sm:$0xff] %v725
        %v728 = vld.sshfl [vmem:[#allocation1] sm:$0xff pattern:$0x73625140]
        %v729 = vld.sshfl [vmem:[#allocation1 + $0x8] sm:$0xff pattern:$0x73625140]
        %v732 = vmax.f32 %v712, %v728
        %v733 = vmax.f32 %v713, %v729
        %735 = vset.pattern.permute.xlu0 0
        %736 = vperm.xlu0 %735, %v283
        %v737 = vpop.permute.xlu0 %736
        %v739 = vperm.slane %v732, 0
        %v740 = vperm.slane %v733, 0
        %v741 = vmul.f32 %v737, %v739
        %v742 = vmul.f32 %v737, %v740
        %743 = vset.pattern.permute.xlu0 1
        %744 = vperm.xlu0 %743, %v283
        %v745 = vpop.permute.xlu0 %744
        %v747 = vperm.slane %v732, 1
        %v748 = vperm.slane %v733, 1
        %v749 = vmul.f32 %v745, %v747
        %v750 = vmul.f32 %v745, %v748
        %v751 = vadd.f32 %v741, %v749
        %v752 = vadd.f32 %v742, %v750
        %v753 = vadd.f32 %v572, %v751
        %v754 = vadd.f32 %v573, %v752
        %755 = vrot.lane.b32.xlu0 %v732, 127
        %v756 = vpop.permute.xlu0 %755
        %757 = vrot.lane.b32.xlu0 %v733, 127
        %v758 = vpop.permute.xlu0 %757
        %v759 = vsel %vm388, %v756, %v758
        %v760 = vsel %vm388, %v758, %v756
        %v763 = vrot.slane %v760, 6
        %v764 = vsel %vm394, %v759, %v763
        %v766 = vsel %vm355, %v764, -3e+38
        %768 = vst [vmem:[#allocation1] ss:$4 sm:$0xff] %v766
        %v769 = vld.sshfl [vmem:[#allocation1] sm:$0xff pattern:$0x73625140]
        %v770 = vld.sshfl [vmem:[#allocation1 + $0x8] sm:$0xff pattern:$0x73625140]
        %v773 = vmax.f32 %v732, %v769
        %v774 = vmax.f32 %v733, %v770
        %775 = vrot.lane.b32.xlu0 %v732, 1
        %v776 = vpop.permute.xlu0 %775
        %777 = vrot.lane.b32.xlu0 %v733, 1
        %v778 = vpop.permute.xlu0 %777
        %v779 = vsel %vm410, %v776, %v778
        %v780 = vsel %vm410, %v778, %v776
        %v783 = vrot.slane %v779, 6
        %v784 = vsel %vm394, %v780, %v783
        %v786 = vsel %vm357, %v784, -3e+38
        %788 = vst [vmem:[#allocation1] ss:$4 sm:$0xff] %v786
        %v789 = vld.sshfl [vmem:[#allocation1] sm:$0xff pattern:$0x73625140]
        %v790 = vld.sshfl [vmem:[#allocation1 + $0x8] sm:$0xff pattern:$0x73625140]
        %v793 = vmax.f32 %v773, %v789
        %v794 = vmax.f32 %v774, %v790
        %795 = vrot.lane.b32.xlu0 %v732, 126
        %v796 = vpop.permute.xlu0 %795
        %797 = vrot.lane.b32.xlu0 %v733, 126
        %v798 = vpop.permute.xlu0 %797
        %v799 = vsel %vm431, %v796, %v798
        %v800 = vsel %vm431, %v798, %v796
        %v803 = vrot.slane %v800, 6
        %v804 = vsel %vm394, %v799, %v803
        %v806 = vsel %vm356, %v804, -3e+38
        %808 = vst [vmem:[#allocation1] ss:$4 sm:$0xff] %v806
        %v809 = vld.sshfl [vmem:[#allocation1] sm:$0xff pattern:$0x73625140]
        %v810 = vld.sshfl [vmem:[#allocation1 + $0x8] sm:$0xff pattern:$0x73625140]
        %v813 = vmax.f32 %v793, %v809
        %v814 = vmax.f32 %v794, %v810
        %815 = vrot.lane.b32.xlu0 %v732, 2
        %v816 = vpop.permute.xlu0 %815
        %817 = vrot.lane.b32.xlu0 %v733, 2
        %v818 = vpop.permute.xlu0 %817
        %v819 = vsel %vm452, %v816, %v818
        %v820 = vsel %vm452, %v818, %v816
        %v823 = vrot.slane %v819, 6
        %v824 = vsel %vm394, %v820, %v823
        %v826 = vsel %vm358, %v824, -3e+38
        %828 = vst [vmem:[#allocation1] ss:$4 sm:$0xff] %v826
        %v829 = vld.sshfl [vmem:[#allocation1] sm:$0xff pattern:$0x73625140]
        %v830 = vld.sshfl [vmem:[#allocation1 + $0x8] sm:$0xff pattern:$0x73625140]
        %v833 = vmax.f32 %v813, %v829
        %v834 = vmax.f32 %v814, %v830
        %835 = vrot.lane.b32.xlu0 %v833, 112
        %v836 = vpop.permute.xlu0 %835
        %837 = vrot.lane.b32.xlu0 %v834, 112
        %v838 = vpop.permute.xlu0 %837
        %v839 = vsel %vm473, %v836, %v838
        %v840 = vsel %vm473, %v838, %v836
        %v843 = vrot.slane %v840, 6
        %v844 = vsel %vm394, %v839, %v843
        %v846 = vsel %vm359, %v844, -3e+38
        %848 = vst [vmem:[#allocation1] ss:$4 sm:$0xff] %v846
        %v849 = vld.sshfl [vmem:[#allocation1] sm:$0xff pattern:$0x73625140]
        %v850 = vld.sshfl [vmem:[#allocation1 + $0x8] sm:$0xff pattern:$0x73625140]
        %v853 = vmax.f32 %v833, %v849
        %v854 = vmax.f32 %v834, %v850
        %855 = vrot.lane.b32.xlu0 %v833, 16
        %v856 = vpop.permute.xlu0 %855
        %857 = vrot.lane.b32.xlu0 %v834, 16
        %v858 = vpop.permute.xlu0 %857
        %v859 = vsel %vm494, %v856, %v858
        %v860 = vsel %vm494, %v858, %v856
        %v863 = vrot.slane %v859, 6
        %v864 = vsel %vm394, %v860, %v863
        %v866 = vsel %vm361, %v864, -3e+38
        %868 = vst [vmem:[#allocation1] ss:$4 sm:$0xff] %v866
        %v869 = vld.sshfl [vmem:[#allocation1] sm:$0xff pattern:$0x73625140]
        %v870 = vld.sshfl [vmem:[#allocation1 + $0x8] sm:$0xff pattern:$0x73625140]
        %v873 = vmax.f32 %v853, %v869
        %v874 = vmax.f32 %v854, %v870
        %875 = vrot.lane.b32.xlu0 %v833, 96
        %v876 = vpop.permute.xlu0 %875
        %877 = vrot.lane.b32.xlu0 %v834, 96
        %v878 = vpop.permute.xlu0 %877
        %v879 = vsel %vm515, %v876, %v878
        %v880 = vsel %vm515, %v878, %v876
        %v883 = vrot.slane %v880, 6
        %v884 = vsel %vm394, %v879, %v883
        %v886 = vsel %vm360, %v884, -3e+38
        %888 = vst [vmem:[#allocation1] ss:$4 sm:$0xff] %v886
        %v889 = vld.sshfl [vmem:[#allocation1] sm:$0xff pattern:$0x73625140]
        %v890 = vld.sshfl [vmem:[#allocation1 + $0x8] sm:$0xff pattern:$0x73625140]
        %v893 = vmax.f32 %v873, %v889
        %v894 = vmax.f32 %v874, %v890
        %895 = vrot.lane.b32.xlu0 %v833, 32
        %v896 = vpop.permute.xlu0 %895
        %897 = vrot.lane.b32.xlu0 %v834, 32
        %v898 = vpop.permute.xlu0 %897
        %v899 = vsel %vm536, %v896, %v898
        %v900 = vsel %vm536, %v898, %v896
        %v903 = vrot.slane %v899, 6
        %v904 = vsel %vm394, %v900, %v903
        %v906 = vsel %vm362, %v904, -3e+38
        %908 = vst [vmem:[#allocation1] ss:$4 sm:$0xff] %v906
        %v909 = vld.sshfl [vmem:[#allocation1] sm:$0xff pattern:$0x73625140]
        %v910 = vld.sshfl [vmem:[#allocation1 + $0x8] sm:$0xff pattern:$0x73625140]
        %v913 = vmax.f32 %v893, %v909
        %v914 = vmax.f32 %v894, %v910
        %916 = vset.pattern.permute.xlu0 0
        %917 = vperm.xlu0 %916, %v284
        %v918 = vpop.permute.xlu0 %917
        %v920 = vperm.slane %v913, 0
        %v921 = vperm.slane %v914, 0
        %v922 = vmul.f32 %v918, %v920
        %v923 = vmul.f32 %v918, %v921
        %924 = vset.pattern.permute.xlu0 1
        %925 = vperm.xlu0 %924, %v284
        %v926 = vpop.permute.xlu0 %925
        %v928 = vperm.slane %v913, 1
        %v929 = vperm.slane %v914, 1
        %v930 = vmul.f32 %v926, %v928
        %v931 = vmul.f32 %v926, %v929
        %v932 = vadd.f32 %v922, %v930
        %v933 = vadd.f32 %v923, %v931
        %v934 = vadd.f32 %v753, %v932
        %v935 = vadd.f32 %v754, %v933
        %v936 = vld [vmem:[%s6] sm:$0xf]
        %938 = vset.pattern.permute.xlu0 0
        %939 = vperm.xlu0 %938, %v936
        %v940 = vpop.permute.xlu0 %939
        %v942 = vadd.f32 %v934, %v940
        %v943 = vadd.f32 %v935, %v940
        %vm944 = vcmp.gt.f32.partialorder %v942, 0.0
        %vm945 = vcmp.gt.f32.partialorder %v943, 0.0
        %v946 = vmul.f32 %v942, 0.1
        %v947 = vmul.f32 %v943, 0.1
        %v948 = vsel %vm944, %v942, %v946
        %v949 = vsel %vm945, %v943, %v947
        %v952 = vrot.slane %v949, 4
        %vm953 = vcmask 1043456
        %v954 = vsel %vm953, %v948, %v952
        %956 = vst [vmem:[%s271] sm:$0xff] %v954
        %s957 = sand.u32 %s181, 1
        %s958 = scalar_lea.sflag [#allocation3], %s957
        %s959 = sand.u32 %s181, 1
        %s960 = smul.addr %s959, 8
        %s961 = scalar_lea.vmem [#allocation2], %s960
        // Predicated region
        $region49: #{tpu_custom_call.1} parent=47 // pred_check
          %p962 = pneg %p191
        $region50: #{tpu_custom_call.1} parent=47 // pred_check_branch
          %964 = sbr.rel (%p962) target = $region52
        $region51: #{tpu_custom_call.1} parent=47 // pred_region
          %966 = vsyncadd %s958, 0
          %s967 = smul.addr %s21, 2
          %s968 = smul.addr %s967, 4
          %s969 = scalar_lea.hbm %s7, %s968
          %s971 = sshll.u32 %s961, 4
          %s972 = int_to_ptr.vmem [resolvable:$true] %s971
          %s973 = sshll.u32 %s969, 4
          %s974 = int_to_ptr.hbm [resolvable:$true] %s973
          %976 = dma.vmem_to_hbm [thread:$0]  %s972, 128, %s974, %s958
        $region52: #{tpu_custom_call.1} parent=47 // pred_fallthru
          _
      $region48: #{tpu_custom_call.1} parent=5 // pred_fallthru
        _
      %p977 = scmp.le.s32.totalorder 2, %s16
      // Predicated region
      $region53: #{tpu_custom_call.1} parent=5 // pred_check
        %p978 = pneg %p977
      $region54: #{tpu_custom_call.1} parent=5 // pred_check_branch
        %980 = sbr.rel (%p978) target = $region56
      $region55: #{tpu_custom_call.1} parent=5 // pred_region
        %s981 = ssub.s32 %s16, 2
        // Predicated region
        $region57: #{tpu_custom_call.1} parent=55 // pred_check
          %p982 = pneg %p197
        $region58: #{tpu_custom_call.1} parent=55 // pred_check_branch
          %984 = sbr.rel (%p982) target = $region60
        $region59: #{tpu_custom_call.1} parent=55 // pred_region
          %s985 = sand.u32 %s182, 1
          %s986 = scalar_lea.sflag [#allocation3], %s985
          %s987 = sand.u32 %s182, 1
          %s988 = smul.addr %s987, 8
          %s989 = scalar_lea.vmem [#allocation2], %s988
          %991 = dma.done %s986, 128
        $region60: #{tpu_custom_call.1} parent=55 // pred_fallthru
          _
      $region56: #{tpu_custom_call.1} parent=5 // pred_fallthru
        _
    $region6: #{tpu_custom_call.1} parent=1 // loop_footer
      %s20 = sadd.s32 1, %s16
    $region7: #{tpu_custom_call.1} parent=1 // loop_footer_branch
      %15 = sbr.rel target = $region3
    $region8: #{tpu_custom_call.1} parent=1 // loop_exit
      _
    %992 = vsyncpa [#allocation3], 1
    %s993 = scalar_lea.sflag [#allocation3], 1
    %994 = vsyncpa %s993, 1

</llo_original>
